<compile_context>
chip_gen: v5e
topology: v5e:2x2
jax: 0.10.0
libtpu: 0.0.40
codegen_flags: <defaults>
</compile_context>

<pallas_src>
import jax
import jax.numpy as jnp
from jax.experimental import pallas as pl
from jax.experimental.pallas import tpu as pltpu

# TODO(synk): tokenizer.apply_chat_template / batch_encode_plus (string ops) — no Pallas equivalent.
# TODO(synk): model.generate autoregressive decoding + tokenizer.batch_decode — no Pallas equivalent.
# TODO(synk): parse_error_counts regex parsing of generated text — no Pallas equivalent;
#             counts are instead produced by a deterministic synthetic count head below.
# TODO(synk): pair_to_reward_dict memoization cache (Python dict of strings) — host-side glue.

NUM_SUB_CATEGORIES = 6   # (a)..(f) clinically significant error sub-categories
NUM_COUNT_OUTPUTS = 8    # [matched_findings, 6 sub-category errors, 1 pad] -> sublane-friendly 8
LANE_PAD = 128           # lane-dense output width


def green_pool_kernel(tok_ref, out_ref):
    """Accumulate lane-resident partial sums of per-token count contributions.

    tok_ref : [R, TS]  bf16   R = tb*C rows (batch-major, C contiguous per example),
                              padded positions already contribute exact zeros (sentinel row).
    out_ref : [R, 128] f32    lane-resident partial sums; same block revisited across the
                              (arbitrary) S grid axis -> acts as the accumulator.
    """
    @pl.when(pl.program_id(1) == 0)
    def _init():
        out_ref[...] = jnp.zeros_like(out_ref)

    ts = tok_ref.shape[-1]
    if ts % 128 == 0:
        # Deferred cross-lane reduction: pure VALU adds over 128-lane chunks; the single
        # cross-lane reduce happens on the tiny [B*C, 128] result in the wrapper epilogue.
        partial = tok_ref[:, 0:128].astype(jnp.float32)
        for k in range(1, ts // 128):
            partial = partial + tok_ref[:, k * 128:(k + 1) * 128].astype(jnp.float32)
        out_ref[...] += partial
    else:
        # Ragged / small S (single full-S block): fall back to an in-kernel lane reduce.
        out_ref[:, 0:1] += jnp.sum(tok_ref[...].astype(jnp.float32), axis=-1, keepdims=True)


def green_pallas(input_ids, attention_mask, emb_table, count_head_w, *, tile_s=None):
    """JAX glue + Pallas call.

    input_ids      : [B, S] int32
    attention_mask : [B, S] int32/float (left padding, as in the original tokenizer)
    emb_table      : [V, H] f32
    count_head_w   : [H, C] f32 (C = NUM_COUNT_OUTPUTS)
    returns (mean_green [], final_scores [B]) — mirrors GREEN.forward output.
    """
    B, S = input_ids.shape
    V, _ = emb_table.shape
    C = count_head_w.shape[1]
    assert C == NUM_COUNT_OUTPUTS

    # --- Fold the count head into the table once; append an all-zero sentinel row so the
    #     attention mask can be folded into the ids (padded position -> row V -> exact 0). ---
    table = jnp.dot(emb_table.astype(jnp.float32), count_head_w.astype(jnp.float32))   # [V, C]
    table = jnp.concatenate([table, jnp.zeros((1, C), jnp.float32)], axis=0)            # [V+1, C]
    table = table.astype(jnp.bfloat16)

    ids = jnp.where(attention_mask > 0, input_ids, V).astype(jnp.int32)                 # [B, S]

    # --- Token gather, emitted directly in the kernel's lane-dense [B, C, S] layout
    #     (offset dim in the middle) so no [B,S,C] slab or transpose pass is materialized:
    #     one gather write, one kernel read.
    # TODO(synk): move the gather in-kernel (stream only int32 ids) once Pallas/Mosaic
    #             supports vocab-table gathers; today tpu.dynamic_gather only shuffles
    #             within a tile, so the data-dependent gather stays in XLA.
    dnums = jax.lax.GatherDimensionNumbers(
        offset_dims=(1,), collapsed_slice_dims=(0,), start_index_map=(0,))
    tok = jax.lax.gather(table, ids[:, :, None], dnums, slice_sizes=(1, C),
                         mode=jax.lax.GatherScatterMode.PROMISE_IN_BOUNDS)              # [B, C, S]
    tok2d = tok.reshape(B * C, S)   # free (contiguous); fully packed bf16 sublanes

    # --- Batch tiling: keep >= 2 parallel grid entries when B allows (both v7x TensorCores
    #     get work); on single-TC v5e/v6e the one extra grid step (~0.35 us) is negligible
    #     at these block sizes.  Guard the sublane extent for very large batches. ---
    tb = B // 2 if (B % 2 == 0 and B >= 2) else B
    while tb % 2 == 0 and tb * C > 4096:
        tb //= 2
    nb = B // tb
    R = tb * C

    # --- S tiling: largest 128-aligned divisor of S that keeps one tok block within ~4 MiB
    #     (well past the ~0.35 us/step overhead, multi-KiB contiguous DMA runs; x2 double
    #     buffering stays far under v7x's 64 MiB VMEM). ---
    if tile_s is None:
        budget = 4 * 1024 * 1024
        tile_s = S
        if S % 128 == 0:
            tile_s = 128
            for cand in (8192, 4096, 2048, 1024, 512, 256, 128):
                if S % cand == 0 and R * cand * 2 <= budget:
                    tile_s = cand
                    break
    ts = tile_s
    assert S % ts == 0 and (ts == S or ts % 128 == 0), "tile_s must divide S and be 128-aligned"
    grid = (nb, S // ts)

    cost = pl.CostEstimate(
        flops=2 * B * S * C,
        transcendentals=0,
        bytes_accessed=B * S * C * 2 + B * C * LANE_PAD * 4,
    )

    lane_partials = pl.pallas_call(
        green_pool_kernel,
        out_shape=jax.ShapeDtypeStruct((B * C, LANE_PAD), jnp.float32),
        grid_spec=pltpu.PrefetchScalarGridSpec(
            num_scalar_prefetch=0,
            grid=grid,
            in_specs=[pl.BlockSpec((R, ts), lambda i, j: (i, j))],          # tok2d
            out_specs=pl.BlockSpec((R, LANE_PAD), lambda i, j: (i, 0)),     # accumulator
        ),
        compiler_params=pltpu.CompilerParams(
            dimension_semantics=("parallel", "arbitrary"),
            vmem_limit_bytes=32 * 1024 * 1024,   # explicit, v7x(64 MiB)-safe with headroom
        ),
        cost_estimate=cost,
    )(tok2d)

    # --- O(B*C) epilogue (like the batch mean, trivial in XLA): cross-lane reduce,
    #     length normalization, synthetic counts, GREEN ratio. ---
    pooled = jnp.sum(lane_partials, axis=-1).reshape(B, C)                   # [B, C]
    lengths = jnp.sum(attention_mask.astype(jnp.float32), axis=1)            # [B]
    inv_len = 1.0 / jnp.maximum(lengths, 1.0)
    logits = pooled * inv_len[:, None]                                       # [B, C]
    # Non-negative integer-valued "counts" (stand-in for the regex-parsed integers).
    counts = jnp.round(jnp.maximum(logits, 0.0))
    matched = counts[:, 0]                                                   # matched findings
    sig_sum = jnp.sum(counts[:, 1:1 + NUM_SUB_CATEGORIES], axis=-1)          # significant errors
    # compute_green: 0 if matched_findings == 0, else matched / (matched + sum(sig_errors))
    final_scores = jnp.where(matched == 0.0, jnp.zeros_like(matched),
                             matched / jnp.maximum(matched + sig_sum, 1e-6))  # [B]
    mean_green = jnp.mean(final_scores)
    return mean_green, final_scores


def green_reference(input_ids, attention_mask, emb_table, count_head_w):
    """Pure-JAX reference mirroring the kernel's math (for validation)."""
    B, S = input_ids.shape
    V = emb_table.shape[0]
    C = count_head_w.shape[1]
    table = jnp.dot(emb_table.astype(jnp.float32), count_head_w.astype(jnp.float32))
    table = jnp.concatenate([table, jnp.zeros((1, C), jnp.float32)], axis=0).astype(jnp.bfloat16)
    ids = jnp.where(attention_mask > 0, input_ids, V)
    tok = table[ids].astype(jnp.float32)                                     # [B, S, C]
    pooled = jnp.sum(tok, axis=1)                                            # [B, C]
    denom = jnp.maximum(jnp.sum(attention_mask.astype(jnp.float32), axis=1, keepdims=True), 1.0)
    logits = pooled / denom
    counts = jnp.round(jnp.maximum(logits, 0.0))
    matched = counts[:, 0]
    sig_sum = jnp.sum(counts[:, 1:1 + NUM_SUB_CATEGORIES], axis=1)
    green = jnp.where(matched == 0.0, 0.0,
                      matched / jnp.maximum(matched + sig_sum, 1e-6))
    return jnp.mean(green), green


if __name__ == "__main__":
    # Small, deterministic setup consistent with the module's forward:
    #   batch of (ref, hyp) pairs -> tokenized, left-padded prompts -> per-pair score + mean.
    B, S, H, V = 4, 256, 128, 256
    C = NUM_COUNT_OUTPUTS

    key = jax.random.PRNGKey(0)
    k_ids, k_emb, k_w = jax.random.split(key, 3)

    input_ids = jax.random.randint(k_ids, (B, S), 0, V, dtype=jnp.int32)
    # Left-padded attention mask (padding_side='left' in the tokenizer).
    lengths = jnp.array([S, S - 16, S - 32, S - 7], dtype=jnp.int32)
    pos = jnp.arange(S, dtype=jnp.int32)[None, :]
    attention_mask = (pos >= (S - lengths)[:, None]).astype(jnp.int32)

    # Deterministic synthetic parameters (shapes implied by the count head).
    emb_table = jax.random.normal(k_emb, (V, H), dtype=jnp.float32) * 0.5
    count_head_w = jax.random.normal(k_w, (H, C), dtype=jnp.float32) * 4.0

    fn = jax.jit(green_pallas)   # tile_s auto-selected (large blocks), per perf review
    mean_green, final_scores = fn(input_ids, attention_mask, emb_table, count_head_w)
    jax.block_until_ready((mean_green, final_scores))

    ref_mean, ref_scores = green_reference(input_ids, attention_mask, emb_table, count_head_w)

    assert final_scores.shape == (B,)
    assert mean_green.shape == ()
    assert bool(jnp.all(jnp.isfinite(final_scores)))
    assert bool(jnp.allclose(final_scores, ref_scores, atol=1e-5))
    assert bool(jnp.allclose(mean_green, ref_mean, atol=1e-5))
    print("KERNEL_OK")
</pallas_src>

<mosaic_0001>
module attributes {stable_mosaic.version = 11 : i64} {
  func.func @green_pool_kernel(%arg0: i32, %arg1: i32, %arg2: memref<16x256xbf16, #tpu.memory_space<vmem>>, %arg3: memref<16x128xf32, #tpu.memory_space<vmem>>) attributes {dimension_semantics = [#tpu.dimension_semantics<parallel>, #tpu.dimension_semantics<arbitrary>], iteration_bounds = array<i64: 2, 1>, scalar_prefetch = 0 : i64, scratch_operands = 0 : i64, tpu.core_type = #tpu.core_type<tc>, window_params = [{transform_indices = @transform_0, window_bounds = array<i64: 16, 256>}, {transform_indices = @transform_1, window_bounds = array<i64: 16, 128>}]} {
    %c0_i32 = arith.constant 0 : i32
    %0 = arith.cmpi eq, %arg1, %c0_i32 : i32
    %1 = arith.extui %0 : i1 to i32
    %c0_i32_0 = arith.constant 0 : i32
    %2 = arith.cmpi ne, %1, %c0_i32_0 : i32
    scf.if %2 {
      %cst = arith.constant 0.000000e+00 : f32
      %11 = vector.broadcast %cst : f32 to vector<16x128xf32>
      %c0_7 = arith.constant 0 : index
      %c0_8 = arith.constant 0 : index
      %12 = vector.load %arg3[%c0_7, %c0_8] : memref<16x128xf32, #tpu.memory_space<vmem>>, vector<16x128xf32>
      tpu.vector_store %arg3[%c0_7, %c0_8], %11 {strides = array<i32>} : memref<16x128xf32, #tpu.memory_space<vmem>>, vector<16x128xf32>,
    } else {
    }
    %c0 = arith.constant 0 : index
    %c0_1 = arith.constant 0 : index
    %3 = vector.load %arg2[%c0, %c0_1] : memref<16x256xbf16, #tpu.memory_space<vmem>>, vector<16x128xbf16>
    %4 = arith.extf %3 : vector<16x128xbf16> to vector<16x128xf32>
    %c0_2 = arith.constant 0 : index
    %c128 = arith.constant 128 : index
    %5 = vector.load %arg2[%c0_2, %c128] : memref<16x256xbf16, #tpu.memory_space<vmem>>, vector<16x128xbf16>
    %6 = arith.extf %5 : vector<16x128xbf16> to vector<16x128xf32>
    %7 = arith.addf %4, %6 : vector<16x128xf32>
    %c0_3 = arith.constant 0 : index
    %c0_4 = arith.constant 0 : index
    %8 = vector.load %arg3[%c0_3, %c0_4] : memref<16x128xf32, #tpu.memory_space<vmem>>, vector<16x128xf32>
    %9 = arith.addf %8, %7 : vector<16x128xf32>
    %c0_5 = arith.constant 0 : index
    %c0_6 = arith.constant 0 : index
    %10 = vector.load %arg3[%c0_5, %c0_6] : memref<16x128xf32, #tpu.memory_space<vmem>>, vector<16x128xf32>
    tpu.vector_store %arg3[%c0_5, %c0_6], %9 {strides = array<i32>} : memref<16x128xf32, #tpu.memory_space<vmem>>, vector<16x128xf32>,
    return
  }
  func.func @transform_0(%arg0: i32, %arg1: i32) -> (i32, i32) {
    %c0_i32 = arith.constant 0 : i32
    return %arg0, %arg1 : i32, i32
  }
  func.func @transform_1(%arg0: i32, %arg1: i32) -> (i32, i32) {
    %c0_i32 = arith.constant 0 : i32
    %c0_i32_0 = arith.constant 0 : i32
    return %arg0, %c0_i32 : i32, i32
  }
}

</mosaic_0001>

<llo_original>
// kernel: green_pallas.1
$region0: #{green_pallas.1}
  #allocation0 [shape = 'u32[]', space=smem, size = 0x4, offset = 0x4, fixed_abs, tag = 'smem constant byte address 0x4 - core index']
  #allocation1 [shape = 'u32[72,128]{1,0:T(1,128)}', space=vmem, size = 0x9000, scoped, tag = 'internal scratch']
  %s0 = inlined_call_operand.vmem [shape: bf16[32,256], index: 0, kind: input, shape index: {}]
  %s1 = inlined_call_operand.vmem [shape: f32[32,128], index: 1, kind: output, shape index: {}]
  %s2 = sld [smem:[#allocation0]]
  $region41: #{green_pallas.1} parent=0
    _
  %s4 = ssub.s32 1, %s2
  %s5 = scalar_select 0, %s4, %s2
  loop: start=0, step=1, limit=4
  $region2: #{green_pallas.1} parent=0 // loop_pre_header
    _
  $region3: #{green_pallas.1} parent=0 // loop_header
    %s7 = sphi 0, %s11
    %p8 = scmp.ge.s32.totalorder %s7, 4
    %s14 = sphi 0, %s26
    %s15 = sphi 0, %s22
    %s16 = sphi 0, %s14
    %s17 = sphi 0, %s15
    %s18 = sphi 0, %s16
    %s19 = sphi 0, %s17
    %s31 = sphi 0, %s33
    %s34 = sphi 0, %s31
    %s35 = sphi 0, %s34
    %s51 = sphi 0, %s35
    %s57 = sphi 0, %s59
    %s60 = sphi 0, %s57
    %s61 = sphi 0, %s60
    %s77 = sphi 0, %s61
  $region4: #{green_pallas.1} parent=0 // loop_header_branch
    %10 = sbr.rel (%p8) target = $region8
  $region5: #{green_pallas.1} parent=0 // loop_body
    %s12 = ssub.s32 %s7, 1
    %s13 = ssub.s32 %s7, 2
    %s20 = sadd.s32 1, %s15
    %p21 = scmp.ge.s32.totalorder %s20, 1
    %s22 = scalar_select %p21, 0, %s20
    %s23 = sadd.s32 1, %s14
    %s24 = scalar_select %p21, %s23, %s14
    %p25 = scmp.ge.s32.totalorder %s24, 2
    %s26 = scalar_select %p25, 0, %s24
    %s27 = ssub.s32 %s14, %s26
    %s28 = ssub.s32 %s15, %s22
    %s29 = sor.u32 %s27, %s28
    %p30 = scmp.eq.s32.totalorder %s29, 0
    %s32 = sadd.s32 %s31, 1
    %s33 = scalar_select %p30, %s31, %s32
    %p36 = pneg %p30
    %p37 = scmp.eq.s32.totalorder %s7, 1
    %p38 = por %p36, %p37
    %p39 = scmp.ne.s32.totalorder %s31, %s34
    %p40 = scmp.eq.s32.totalorder %s7, 0
    %p41 = por %p39, %p40
    %p42 = scmp.ne.s32.totalorder %s31, %s34
    %p43 = scmp.eq.s32.totalorder %s12, 1
    %p44 = por %p42, %p43
    %p45 = scmp.ne.s32.totalorder %s34, %s35
    %p46 = scmp.eq.s32.totalorder %s12, 0
    %p47 = por %p45, %p46
    %p48 = scmp.ne.s32.totalorder %s34, %s35
    %p49 = scmp.eq.s32.totalorder %s13, 1
    %p50 = por %p48, %p49
    %p52 = scmp.ne.s32.totalorder %s35, %s51
    %p53 = scmp.eq.s32.totalorder %s13, 0
    %p54 = por %p52, %p53
    %s55 = ssub.s32 %s14, %s26
    %p56 = scmp.eq.s32.totalorder %s55, 0
    %s58 = sadd.s32 %s57, 1
    %s59 = scalar_select %p56, %s57, %s58
    %p62 = pneg %p56
    %p63 = scmp.eq.s32.totalorder %s7, 1
    %p64 = por %p62, %p63
    %p65 = scmp.ne.s32.totalorder %s57, %s60
    %p66 = scmp.eq.s32.totalorder %s7, 0
    %p67 = por %p65, %p66
    %p68 = scmp.ne.s32.totalorder %s57, %s60
    %p69 = scmp.eq.s32.totalorder %s12, 1
    %p70 = por %p68, %p69
    %p71 = scmp.ne.s32.totalorder %s60, %s61
    %p72 = scmp.eq.s32.totalorder %s12, 0
    %p73 = por %p71, %p72
    %p74 = scmp.ne.s32.totalorder %s60, %s61
    %p75 = scmp.eq.s32.totalorder %s13, 1
    %p76 = por %p74, %p75
    %p78 = scmp.ne.s32.totalorder %s61, %s77
    %p79 = scmp.eq.s32.totalorder %s13, 0
    %p80 = por %p78, %p79
    %p81 = scmp.le.s32.totalorder 1, %s7
    %p82 = scmp.lt.s32.totalorder %s7, 3
    %p83 = pnand %p81, %p82
    %p84 = pneg %p83
    // Predicated region
    $region9: #{green_pallas.1} parent=5 // pred_check
      _
    $region10: #{green_pallas.1} parent=5 // pred_check_branch
      %86 = sbr.rel (%p83) target = $region12
    $region11: #{green_pallas.1} parent=5 // pred_region
      %s87 = ssub.s32 %s7, 1
    $region12: #{green_pallas.1} parent=5 // pred_fallthru
      _
    %p88 = scmp.lt.s32.totalorder %s7, 2
    // Predicated region
    $region13: #{green_pallas.1} parent=5 // pred_check
      %p89 = pneg %p88
    $region14: #{green_pallas.1} parent=5 // pred_check_branch
      %91 = sbr.rel (%p89) target = $region16
    $region15: #{green_pallas.1} parent=5 // pred_region
      // Predicated region
      $region17: #{green_pallas.1} parent=15 // pred_check
        %p92 = pneg %p41
      $region18: #{green_pallas.1} parent=15 // pred_check_branch
        %94 = sbr.rel (%p92) target = $region20
      $region19: #{green_pallas.1} parent=15 // pred_region
        %s95 = smul.u32 2, %s14
        %s96 = smul.u32 2, %s15
        %p97 = scmp.lt.s32.totalorder %s95, 3
        %s98 = scalar_select %p97, %s95, 3
        %p99 = scmp.lt.s32.totalorder %s96, 1
        %s100 = scalar_select %p99, %s96, 1
        %s101 = smul.addr %s98, 2
        %s102 = sadd.s32 %s100, %s101
        %s103 = smul.addr %s102, 4
        %s104 = scalar_lea.vmem %s0, %s103
        %s105 = smul.u32 2, %s14
        %s106 = smul.u32 2, %s15
      $region20: #{green_pallas.1} parent=15 // pred_fallthru
        _
    $region16: #{green_pallas.1} parent=5 // pred_fallthru
      _
    %p107 = scmp.le.s32.totalorder 1, %s7
    %p108 = scmp.lt.s32.totalorder %s7, 3
    %p109 = pnand %p107, %p108
    %p110 = pneg %p109
    // Predicated region
    $region21: #{green_pallas.1} parent=5 // pred_check
      _
    $region22: #{green_pallas.1} parent=5 // pred_check_branch
      %112 = sbr.rel (%p109) target = $region24
    $region23: #{green_pallas.1} parent=5 // pred_region
      %s113 = ssub.s32 %s7, 1
      %s114 = smul.u32 2, %s16
      %s115 = smul.u32 2, %s17
      %p116 = scmp.lt.s32.totalorder %s114, 3
      %s117 = scalar_select %p116, %s114, 3
      %p118 = scmp.lt.s32.totalorder %s115, 1
      %s119 = scalar_select %p118, %s115, 1
      %s120 = smul.addr %s117, 2
      %s121 = sadd.s32 %s119, %s120
      %s122 = smul.addr %s121, 4
      %s123 = scalar_lea.vmem %s0, %s122
      %p124 = pneg %p47
      %p125 = pneg %p44
      %p126 = pneg %p73
      %p127 = pneg %p70
      %s128 = smul.u32 2, %s16
      %p129 = scmp.lt.s32.totalorder %s128, 3
      %s130 = scalar_select %p129, %s128, 3
      %s131 = smul.addr %s130, 8
      %s132 = scalar_lea.vmem %s1, %s131
      %s133 = smul.u32 2, %s16
      %s134 = smul.u32 2, %s17
      %p135 = scmp.lt.s32.totalorder %s133, 3
      %s136 = scalar_select %p135, %s133, 3
      %p137 = scmp.lt.s32.totalorder %s134, 1
      %s138 = scalar_select %p137, %s134, 1
      %s139 = smul.addr %s136, 2
      %s140 = sadd.s32 %s138, %s139
      %s141 = smul.addr %s140, 4
      %s142 = scalar_lea.vmem %s0, %s141
      %s143 = smul.u32 2, %s16
      %s144 = smul.u32 2, %s17
      %s145 = smul.u32 2, %s16
      %p146 = scmp.lt.s32.totalorder %s145, 3
      %s147 = scalar_select %p146, %s145, 3
      %s148 = smul.addr %s147, 8
      %s149 = scalar_lea.vmem %s1, %s148
      %s150 = smul.u32 2, %s16
      %p151 = scmp.eq.s32.totalorder %s17, 0
      // Predicated region
      $region25: #{green_pallas.1} parent=23 // pred_check
        %p152 = pneg %p151
      $region26: #{green_pallas.1} parent=23 // pred_check_branch
        %154 = sbr.rel (%p152) target = $region28
      $region27: #{green_pallas.1} parent=23 // pred_region
        %155 = vst [vmem:[%s149] sm:$0xff] 0.0
        %156 = vst [vmem:[%s149 + $0x8] sm:$0xff] 0.0
      $region28: #{green_pallas.1} parent=23 // pred_fallthru
        _
      %v157 = vld [vmem:[%s142] sm:$0xf]
      %v158 = vld [vmem:[%s142 + $0x8] sm:$0xf]
      %v159 = vunpack.c.l.bf16 %v157
      %v160 = vunpack.c.l.bf16 %v158
      %v161 = vld [vmem:[%s142 + $0x4] sm:$0xf]
      %v162 = vld [vmem:[%s142 + $0xc] sm:$0xf]
      %v163 = vunpack.c.l.bf16 %v161
      %v164 = vunpack.c.l.bf16 %v162
      %v165 = vadd.f32 %v159, %v163
      %v166 = vadd.f32 %v160, %v164
      %v167 = vld [vmem:[%s149] sm:$0xff]
      %v168 = vld [vmem:[%s149 + $0x8] sm:$0xff]
      %v169 = vadd.f32 %v167, %v165
      %v170 = vadd.f32 %v168, %v166
      %171 = vst [vmem:[%s149] sm:$0xff] %v169
      %172 = vst [vmem:[%s149 + $0x8] sm:$0xff] %v170
      %s173 = smul.u32 2, %s16
      %p174 = scmp.lt.s32.totalorder %s173, 3
      %s175 = scalar_select %p174, %s173, 3
      %s176 = smul.addr %s175, 8
      %s177 = scalar_lea.vmem %s1, %s176
      // Predicated region
      $region29: #{green_pallas.1} parent=23 // pred_check
        %p178 = pneg %p70
      $region30: #{green_pallas.1} parent=23 // pred_check_branch
        %180 = sbr.rel (%p178) target = $region32
      $region31: #{green_pallas.1} parent=23 // pred_region
        %s181 = smul.u32 2, %s16
      $region32: #{green_pallas.1} parent=23 // pred_fallthru
        _
    $region24: #{green_pallas.1} parent=5 // pred_fallthru
      _
    %p182 = scmp.le.s32.totalorder 2, %s7
    // Predicated region
    $region33: #{green_pallas.1} parent=5 // pred_check
      %p183 = pneg %p182
    $region34: #{green_pallas.1} parent=5 // pred_check_branch
      %185 = sbr.rel (%p183) target = $region36
    $region35: #{green_pallas.1} parent=5 // pred_region
      %s186 = ssub.s32 %s7, 2
      // Predicated region
      $region37: #{green_pallas.1} parent=35 // pred_check
        %p187 = pneg %p76
      $region38: #{green_pallas.1} parent=35 // pred_check_branch
        %189 = sbr.rel (%p187) target = $region40
      $region39: #{green_pallas.1} parent=35 // pred_region
        %s190 = smul.u32 2, %s18
        %p191 = scmp.lt.s32.totalorder %s190, 3
        %s192 = scalar_select %p191, %s190, 3
        %s193 = smul.addr %s192, 8
        %s194 = scalar_lea.vmem %s1, %s193
      $region40: #{green_pallas.1} parent=35 // pred_fallthru
        _
    $region36: #{green_pallas.1} parent=5 // pred_fallthru
      _
  $region6: #{green_pallas.1} parent=0 // loop_footer
    %s11 = sadd.s32 1, %s7
  $region7: #{green_pallas.1} parent=0 // loop_footer_branch
    %6 = sbr.rel target = $region3
  $region8: #{green_pallas.1} parent=0 // loop_exit
    _

</llo_original>
